<compile_context>
chip_gen: v5e
topology: v5e:2x2
jax: 0.10.0
libtpu: 0.0.40
codegen_flags: <defaults>
</compile_context>

<pallas_src>
import jax
import jax.numpy as jnp
from jax.experimental import pallas as pl
from jax.experimental.pallas import tpu as pltpu


def neuron_model_kernel(xT_ref, w_ref, b_ref, o_ref):
    # xT_ref: (F, TB) VMEM, batch on the lane axis (lane-dense).
    # w_ref : (H, F) SMEM scalars;  b_ref: (F,) SMEM scalars.
    # o_ref : (F, TB) VMEM.
    F = xT_ref.shape[0]
    H = w_ref.shape[0]

    x = xT_ref[...]  # (F, TB) single dense load

    # Layer 1 (hidden): hT[j] = relu(sum_f W[j, f] * xT[f])  — unrolled VPU FMAs
    h_rows = []
    for j in range(H):
        acc = w_ref[j, 0] * x[0:1, :]
        for f in range(1, F):
            acc = acc + w_ref[j, f] * x[f:f + 1, :]
        h_rows.append(jnp.maximum(acc, 0.0))  # (1, TB)

    # Layer 2 (output): outT[f] = relu(sum_j W[j, f] * hT[j] + b[f])
    for f in range(F):
        acc = h_rows[0] * w_ref[0, f]
        for j in range(1, H):
            acc = acc + h_rows[j] * w_ref[j, f]
        o_ref[f:f + 1, :] = jnp.maximum(acc + b_ref[f], 0.0)


def _round_up(n, m):
    return ((n + m - 1) // m) * m


def neuron_model_forward(x, W, b, *, max_block_batch=32768):
    """NeuronModel.forward in Pallas.

    x: (B, F) float32, W: (H, F) float32, b: (F,) float32 -> (B, F) float32.
    """
    B, F = x.shape
    H, Fw = W.shape
    assert Fw == F and b.shape == (F,)

    LANE = 128
    Bp = _round_up(B, LANE)
    # Prefer ~2 large grid steps (v7x megacore: one block per TensorCore),
    # capped so a tile never grows unreasonably for huge batches.
    TB = min(max_block_batch, max(LANE, _round_up(-(-Bp // 2), LANE)))
    Bp = _round_up(Bp, TB)
    grid = (Bp // TB,)

    # Batch-in-lanes layout: (F, B).  Only pad the batch (lane) axis if needed;
    # zero-padded lanes compute relu(b) and are sliced off below.
    xT = x.T
    if Bp != B:
        xT = jnp.pad(xT, ((0, 0), (0, Bp - B)))

    outT = pl.pallas_call(
        neuron_model_kernel,
        out_shape=jax.ShapeDtypeStruct((F, Bp), jnp.float32),
        grid=grid,
        in_specs=[
            pl.BlockSpec((F, TB), lambda i: (0, i)),                # xT tiles
            pl.BlockSpec(memory_space=pltpu.MemorySpace.SMEM),      # W scalars
            pl.BlockSpec(memory_space=pltpu.MemorySpace.SMEM),      # b scalars
        ],
        out_specs=pl.BlockSpec((F, TB), lambda i: (0, i)),
        compiler_params=pltpu.CompilerParams(
            dimension_semantics=("parallel",)),
    )(xT, W, b)

    out = outT[:, :B] if Bp != B else outT
    return out.T


def reference_forward(x, W, b):
    h = jnp.maximum(x @ W.T, 0.0)
    return jnp.maximum(h @ W + b, 0.0)


if __name__ == "__main__":
    feature_count = 5
    hidden_count = 2
    batch = 1024  # matches the module's generate_batch(1024) usage

    key = jax.random.PRNGKey(0)
    k_w, k_x = jax.random.split(key)

    # Deterministic xavier_normal_-style init for W (hidden_count, feature_count).
    xavier_std = (2.0 / (feature_count + hidden_count)) ** 0.5
    W = xavier_std * jax.random.normal(
        k_w, (hidden_count, feature_count), dtype=jnp.float32)
    b = jnp.zeros((feature_count,), dtype=jnp.float32)

    # Example batch (analogous to generate_batch with feature_probability=1.0).
    x = jax.random.uniform(k_x, (batch, feature_count), dtype=jnp.float32)

    out = neuron_model_forward(x, W, b)
    out = jax.block_until_ready(out)

    ref = reference_forward(x, W, b)
    assert out.shape == (batch, feature_count)
    assert jnp.allclose(out, ref, atol=1e-5, rtol=1e-5), "mismatch vs reference"

    print("KERNEL_OK")
</pallas_src>

<mosaic_0001>
module attributes {stable_mosaic.version = 11 : i64} {
  func.func @neuron_model_kernel(%arg0: i32, %arg1: memref<5x512xf32, #tpu.memory_space<vmem>>, %arg2: memref<2x5xf32, #tpu.memory_space<smem>>, %arg3: memref<5xf32, #tpu.memory_space<smem>>, %arg4: memref<5x512xf32, #tpu.memory_space<vmem>>) attributes {dimension_semantics = [#tpu.dimension_semantics<parallel>], iteration_bounds = array<i64: 2>, scalar_prefetch = 0 : i64, scratch_operands = 0 : i64, tpu.core_type = #tpu.core_type<tc>, window_params = [{transform_indices = @transform_0, window_bounds = array<i64: 5, 512>}, {transform_indices = @transform_1, window_bounds = array<i64: 2, 5>}, {transform_indices = @transform_2, window_bounds = array<i64: 5>}, {transform_indices = @transform_3, window_bounds = array<i64: 5, 512>}]} {
    %c0 = arith.constant 0 : index
    %c0_0 = arith.constant 0 : index
    %0 = vector.load %arg1[%c0, %c0_0] : memref<5x512xf32, #tpu.memory_space<vmem>>, vector<5x512xf32>
    %c0_1 = arith.constant 0 : index
    %c0_2 = arith.constant 0 : index
    %1 = memref.load %arg2[%c0_1, %c0_2] : memref<2x5xf32, #tpu.memory_space<smem>>
    %2 = vector.extract_strided_slice %0 {offsets = [0, 0], sizes = [1, 512], strides = [1, 1]} : vector<5x512xf32> to vector<1x512xf32>
    %3 = vector.broadcast %1 : f32 to vector<1x512xf32>
    %4 = arith.mulf %3, %2 : vector<1x512xf32>
    %c0_3 = arith.constant 0 : index
    %c1 = arith.constant 1 : index
    %5 = memref.load %arg2[%c0_3, %c1] : memref<2x5xf32, #tpu.memory_space<smem>>
    %6 = vector.extract_strided_slice %0 {offsets = [1, 0], sizes = [1, 512], strides = [1, 1]} : vector<5x512xf32> to vector<1x512xf32>
    %7 = vector.broadcast %5 : f32 to vector<1x512xf32>
    %8 = arith.mulf %7, %6 : vector<1x512xf32>
    %9 = arith.addf %4, %8 : vector<1x512xf32>
    %c0_4 = arith.constant 0 : index
    %c2 = arith.constant 2 : index
    %10 = memref.load %arg2[%c0_4, %c2] : memref<2x5xf32, #tpu.memory_space<smem>>
    %11 = vector.extract_strided_slice %0 {offsets = [2, 0], sizes = [1, 512], strides = [1, 1]} : vector<5x512xf32> to vector<1x512xf32>
    %12 = vector.broadcast %10 : f32 to vector<1x512xf32>
    %13 = arith.mulf %12, %11 : vector<1x512xf32>
    %14 = arith.addf %9, %13 : vector<1x512xf32>
    %c0_5 = arith.constant 0 : index
    %c3 = arith.constant 3 : index
    %15 = memref.load %arg2[%c0_5, %c3] : memref<2x5xf32, #tpu.memory_space<smem>>
    %16 = vector.extract_strided_slice %0 {offsets = [3, 0], sizes = [1, 512], strides = [1, 1]} : vector<5x512xf32> to vector<1x512xf32>
    %17 = vector.broadcast %15 : f32 to vector<1x512xf32>
    %18 = arith.mulf %17, %16 : vector<1x512xf32>
    %19 = arith.addf %14, %18 : vector<1x512xf32>
    %c0_6 = arith.constant 0 : index
    %c4 = arith.constant 4 : index
    %20 = memref.load %arg2[%c0_6, %c4] : memref<2x5xf32, #tpu.memory_space<smem>>
    %21 = vector.extract_strided_slice %0 {offsets = [4, 0], sizes = [1, 512], strides = [1, 1]} : vector<5x512xf32> to vector<1x512xf32>
    %22 = vector.broadcast %20 : f32 to vector<1x512xf32>
    %23 = arith.mulf %22, %21 : vector<1x512xf32>
    %24 = arith.addf %19, %23 : vector<1x512xf32>
    %cst = arith.constant 0.000000e+00 : f32
    %25 = vector.broadcast %cst : f32 to vector<1x512xf32>
    %26 = arith.maximumf %24, %25 : vector<1x512xf32>
    %c1_7 = arith.constant 1 : index
    %c0_8 = arith.constant 0 : index
    %27 = memref.load %arg2[%c1_7, %c0_8] : memref<2x5xf32, #tpu.memory_space<smem>>
    %28 = vector.extract_strided_slice %0 {offsets = [0, 0], sizes = [1, 512], strides = [1, 1]} : vector<5x512xf32> to vector<1x512xf32>
    %29 = vector.broadcast %27 : f32 to vector<1x512xf32>
    %30 = arith.mulf %29, %28 : vector<1x512xf32>
    %c1_9 = arith.constant 1 : index
    %c1_10 = arith.constant 1 : index
    %31 = memref.load %arg2[%c1_9, %c1_10] : memref<2x5xf32, #tpu.memory_space<smem>>
    %32 = vector.extract_strided_slice %0 {offsets = [1, 0], sizes = [1, 512], strides = [1, 1]} : vector<5x512xf32> to vector<1x512xf32>
    %33 = vector.broadcast %31 : f32 to vector<1x512xf32>
    %34 = arith.mulf %33, %32 : vector<1x512xf32>
    %35 = arith.addf %30, %34 : vector<1x512xf32>
    %c1_11 = arith.constant 1 : index
    %c2_12 = arith.constant 2 : index
    %36 = memref.load %arg2[%c1_11, %c2_12] : memref<2x5xf32, #tpu.memory_space<smem>>
    %37 = vector.extract_strided_slice %0 {offsets = [2, 0], sizes = [1, 512], strides = [1, 1]} : vector<5x512xf32> to vector<1x512xf32>
    %38 = vector.broadcast %36 : f32 to vector<1x512xf32>
    %39 = arith.mulf %38, %37 : vector<1x512xf32>
    %40 = arith.addf %35, %39 : vector<1x512xf32>
    %c1_13 = arith.constant 1 : index
    %c3_14 = arith.constant 3 : index
    %41 = memref.load %arg2[%c1_13, %c3_14] : memref<2x5xf32, #tpu.memory_space<smem>>
    %42 = vector.extract_strided_slice %0 {offsets = [3, 0], sizes = [1, 512], strides = [1, 1]} : vector<5x512xf32> to vector<1x512xf32>
    %43 = vector.broadcast %41 : f32 to vector<1x512xf32>
    %44 = arith.mulf %43, %42 : vector<1x512xf32>
    %45 = arith.addf %40, %44 : vector<1x512xf32>
    %c1_15 = arith.constant 1 : index
    %c4_16 = arith.constant 4 : index
    %46 = memref.load %arg2[%c1_15, %c4_16] : memref<2x5xf32, #tpu.memory_space<smem>>
    %47 = vector.extract_strided_slice %0 {offsets = [4, 0], sizes = [1, 512], strides = [1, 1]} : vector<5x512xf32> to vector<1x512xf32>
    %48 = vector.broadcast %46 : f32 to vector<1x512xf32>
    %49 = arith.mulf %48, %47 : vector<1x512xf32>
    %50 = arith.addf %45, %49 : vector<1x512xf32>
    %cst_17 = arith.constant 0.000000e+00 : f32
    %51 = vector.broadcast %cst_17 : f32 to vector<1x512xf32>
    %52 = arith.maximumf %50, %51 : vector<1x512xf32>
    %c0_18 = arith.constant 0 : index
    %c0_19 = arith.constant 0 : index
    %53 = memref.load %arg2[%c0_18, %c0_19] : memref<2x5xf32, #tpu.memory_space<smem>>
    %54 = vector.broadcast %53 : f32 to vector<1x512xf32>
    %55 = arith.mulf %26, %54 : vector<1x512xf32>
    %c1_20 = arith.constant 1 : index
    %c0_21 = arith.constant 0 : index
    %56 = memref.load %arg2[%c1_20, %c0_21] : memref<2x5xf32, #tpu.memory_space<smem>>
    %57 = vector.broadcast %56 : f32 to vector<1x512xf32>
    %58 = arith.mulf %52, %57 : vector<1x512xf32>
    %59 = arith.addf %55, %58 : vector<1x512xf32>
    %c0_22 = arith.constant 0 : index
    %60 = memref.load %arg3[%c0_22] : memref<5xf32, #tpu.memory_space<smem>>
    %61 = vector.broadcast %60 : f32 to vector<1x512xf32>
    %62 = arith.addf %59, %61 : vector<1x512xf32>
    %cst_23 = arith.constant 0.000000e+00 : f32
    %63 = vector.broadcast %cst_23 : f32 to vector<1x512xf32>
    %64 = arith.maximumf %62, %63 : vector<1x512xf32>
    %c0_24 = arith.constant 0 : index
    %c0_25 = arith.constant 0 : index
    %65 = vector.load %arg4[%c0_24, %c0_25] : memref<5x512xf32, #tpu.memory_space<vmem>>, vector<1x512xf32>
    tpu.vector_store %arg4[%c0_24, %c0_25], %64 {strides = array<i32>} : memref<5x512xf32, #tpu.memory_space<vmem>>, vector<1x512xf32>,
    %c0_26 = arith.constant 0 : index
    %c1_27 = arith.constant 1 : index
    %66 = memref.load %arg2[%c0_26, %c1_27] : memref<2x5xf32, #tpu.memory_space<smem>>
    %67 = vector.broadcast %66 : f32 to vector<1x512xf32>
    %68 = arith.mulf %26, %67 : vector<1x512xf32>
    %c1_28 = arith.constant 1 : index
    %c1_29 = arith.constant 1 : index
    %69 = memref.load %arg2[%c1_28, %c1_29] : memref<2x5xf32, #tpu.memory_space<smem>>
    %70 = vector.broadcast %69 : f32 to vector<1x512xf32>
    %71 = arith.mulf %52, %70 : vector<1x512xf32>
    %72 = arith.addf %68, %71 : vector<1x512xf32>
    %c1_30 = arith.constant 1 : index
    %73 = memref.load %arg3[%c1_30] : memref<5xf32, #tpu.memory_space<smem>>
    %74 = vector.broadcast %73 : f32 to vector<1x512xf32>
    %75 = arith.addf %72, %74 : vector<1x512xf32>
    %cst_31 = arith.constant 0.000000e+00 : f32
    %76 = vector.broadcast %cst_31 : f32 to vector<1x512xf32>
    %77 = arith.maximumf %75, %76 : vector<1x512xf32>
    %c1_32 = arith.constant 1 : index
    %c0_33 = arith.constant 0 : index
    %78 = vector.load %arg4[%c1_32, %c0_33] : memref<5x512xf32, #tpu.memory_space<vmem>>, vector<1x512xf32>
    tpu.vector_store %arg4[%c1_32, %c0_33], %77 {strides = array<i32>} : memref<5x512xf32, #tpu.memory_space<vmem>>, vector<1x512xf32>,
    %c0_34 = arith.constant 0 : index
    %c2_35 = arith.constant 2 : index
    %79 = memref.load %arg2[%c0_34, %c2_35] : memref<2x5xf32, #tpu.memory_space<smem>>
    %80 = vector.broadcast %79 : f32 to vector<1x512xf32>
    %81 = arith.mulf %26, %80 : vector<1x512xf32>
    %c1_36 = arith.constant 1 : index
    %c2_37 = arith.constant 2 : index
    %82 = memref.load %arg2[%c1_36, %c2_37] : memref<2x5xf32, #tpu.memory_space<smem>>
    %83 = vector.broadcast %82 : f32 to vector<1x512xf32>
    %84 = arith.mulf %52, %83 : vector<1x512xf32>
    %85 = arith.addf %81, %84 : vector<1x512xf32>
    %c2_38 = arith.constant 2 : index
    %86 = memref.load %arg3[%c2_38] : memref<5xf32, #tpu.memory_space<smem>>
    %87 = vector.broadcast %86 : f32 to vector<1x512xf32>
    %88 = arith.addf %85, %87 : vector<1x512xf32>
    %cst_39 = arith.constant 0.000000e+00 : f32
    %89 = vector.broadcast %cst_39 : f32 to vector<1x512xf32>
    %90 = arith.maximumf %88, %89 : vector<1x512xf32>
    %c2_40 = arith.constant 2 : index
    %c0_41 = arith.constant 0 : index
    %91 = vector.load %arg4[%c2_40, %c0_41] : memref<5x512xf32, #tpu.memory_space<vmem>>, vector<1x512xf32>
    tpu.vector_store %arg4[%c2_40, %c0_41], %90 {strides = array<i32>} : memref<5x512xf32, #tpu.memory_space<vmem>>, vector<1x512xf32>,
    %c0_42 = arith.constant 0 : index
    %c3_43 = arith.constant 3 : index
    %92 = memref.load %arg2[%c0_42, %c3_43] : memref<2x5xf32, #tpu.memory_space<smem>>
    %93 = vector.broadcast %92 : f32 to vector<1x512xf32>
    %94 = arith.mulf %26, %93 : vector<1x512xf32>
    %c1_44 = arith.constant 1 : index
    %c3_45 = arith.constant 3 : index
    %95 = memref.load %arg2[%c1_44, %c3_45] : memref<2x5xf32, #tpu.memory_space<smem>>
    %96 = vector.broadcast %95 : f32 to vector<1x512xf32>
    %97 = arith.mulf %52, %96 : vector<1x512xf32>
    %98 = arith.addf %94, %97 : vector<1x512xf32>
    %c3_46 = arith.constant 3 : index
    %99 = memref.load %arg3[%c3_46] : memref<5xf32, #tpu.memory_space<smem>>
    %100 = vector.broadcast %99 : f32 to vector<1x512xf32>
    %101 = arith.addf %98, %100 : vector<1x512xf32>
    %cst_47 = arith.constant 0.000000e+00 : f32
    %102 = vector.broadcast %cst_47 : f32 to vector<1x512xf32>
    %103 = arith.maximumf %101, %102 : vector<1x512xf32>
    %c3_48 = arith.constant 3 : index
    %c0_49 = arith.constant 0 : index
    %104 = vector.load %arg4[%c3_48, %c0_49] : memref<5x512xf32, #tpu.memory_space<vmem>>, vector<1x512xf32>
    tpu.vector_store %arg4[%c3_48, %c0_49], %103 {strides = array<i32>} : memref<5x512xf32, #tpu.memory_space<vmem>>, vector<1x512xf32>,
    %c0_50 = arith.constant 0 : index
    %c4_51 = arith.constant 4 : index
    %105 = memref.load %arg2[%c0_50, %c4_51] : memref<2x5xf32, #tpu.memory_space<smem>>
    %106 = vector.broadcast %105 : f32 to vector<1x512xf32>
    %107 = arith.mulf %26, %106 : vector<1x512xf32>
    %c1_52 = arith.constant 1 : index
    %c4_53 = arith.constant 4 : index
    %108 = memref.load %arg2[%c1_52, %c4_53] : memref<2x5xf32, #tpu.memory_space<smem>>
    %109 = vector.broadcast %108 : f32 to vector<1x512xf32>
    %110 = arith.mulf %52, %109 : vector<1x512xf32>
    %111 = arith.addf %107, %110 : vector<1x512xf32>
    %c4_54 = arith.constant 4 : index
    %112 = memref.load %arg3[%c4_54] : memref<5xf32, #tpu.memory_space<smem>>
    %113 = vector.broadcast %112 : f32 to vector<1x512xf32>
    %114 = arith.addf %111, %113 : vector<1x512xf32>
    %cst_55 = arith.constant 0.000000e+00 : f32
    %115 = vector.broadcast %cst_55 : f32 to vector<1x512xf32>
    %116 = arith.maximumf %114, %115 : vector<1x512xf32>
    %c4_56 = arith.constant 4 : index
    %c0_57 = arith.constant 0 : index
    %117 = vector.load %arg4[%c4_56, %c0_57] : memref<5x512xf32, #tpu.memory_space<vmem>>, vector<1x512xf32>
    tpu.vector_store %arg4[%c4_56, %c0_57], %116 {strides = array<i32>} : memref<5x512xf32, #tpu.memory_space<vmem>>, vector<1x512xf32>,
    return
  }
  func.func @transform_0(%arg0: i32) -> (i32, i32) {
    %c0_i32 = arith.constant 0 : i32
    %c0_i32_0 = arith.constant 0 : i32
    return %c0_i32, %arg0 : i32, i32
  }
  func.func @transform_1(%arg0: i32) -> (i32, i32) {
    %c0_i32 = arith.constant 0 : i32
    %c0_i32_0 = arith.constant 0 : i32
    %c0_i32_1 = arith.constant 0 : i32
    return %c0_i32, %c0_i32_0 : i32, i32
  }
  func.func @transform_2(%arg0: i32) -> i32 {
    %c0_i32 = arith.constant 0 : i32
    %c0_i32_0 = arith.constant 0 : i32
    return %c0_i32 : i32
  }
  func.func @transform_3(%arg0: i32) -> (i32, i32) {
    %c0_i32 = arith.constant 0 : i32
    %c0_i32_0 = arith.constant 0 : i32
    return %c0_i32, %arg0 : i32, i32
  }
}

</mosaic_0001>

<llo_original>
// kernel: tpu_custom_call.1
$region0: #{tpu_custom_call.1}
  #allocation0 [shape = 'u32[]', space=smem, size = 0x4, offset = 0x4, fixed_abs, tag = 'smem constant byte address 0x4 - core index']
  #allocation1 [shape = 'u32[72,128]{1,0:T(1,128)}', space=vmem, size = 0x9000, scoped, tag = 'internal scratch']
  %s0 = inlined_call_operand.hbm [shape: f32[5,1024], index: 0, kind: input, shape index: {}]
  %s1 = inlined_call_operand.hbm [shape: f32[2,5], index: 1, kind: input, shape index: {}]
  %s2 = inlined_call_operand.vmem [shape: f32[5], index: 2, kind: input, shape index: {}]
  %s3 = inlined_call_operand.hbm [shape: f32[5,1024], index: 3, kind: output, shape index: {}]
  %s4 = sld [smem:[#allocation0]]
  $region57: #{tpu_custom_call.1} parent=0
    _
  %s6 = ssub.s32 1, %s4
  %s7 = scalar_select 0, %s6, %s4
  $region1: #{tpu_custom_call.1} parent=0
    #allocation2 [shape = 'u8[32768]{0}', space=vmem, size = 0x8000, scoped, tag = 'input window, operand 0']
    #allocation3 [shape = 's32[2]{0}', space=sflag, size = 0x8, scoped, tag = 'scoped memory for tpu_custom_call.1']
    #allocation4 [shape = 's32[2]{0}', space=sflag, size = 0x8, scoped, tag = 'scoped memory for tpu_custom_call.1']
    #allocation5 [shape = 's32[2]{0}', space=sflag, size = 0x8, scoped, tag = 'scoped memory for tpu_custom_call.1']
    #allocation6 [shape = 's32[2]{0}', space=sflag, size = 0x8, scoped, tag = 'scoped memory for tpu_custom_call.1']
    #allocation7 [shape = 'u8[1024]{0}', space=smem, size = 0x400, scoped, tag = 'input window, operand 1, single buffered']
    #allocation8 [shape = 'u8[512]{0}', space=smem, size = 0x200, scoped, tag = 'input window, operand 2, single buffered']
    #allocation9 [shape = 'u8[32768]{0}', space=vmem, size = 0x8000, scoped, tag = 'output window, operand 0']
    %8 = vsyncpa [#allocation3], 0
    %s9 = scalar_lea.sflag [#allocation3], 1
    %10 = vsyncpa %s9, 0
    %11 = vsyncpa [#allocation5], 0
    %12 = vsyncpa [#allocation6], 0
    %13 = vsyncpa [#allocation4], 0
    %s14 = scalar_lea.sflag [#allocation4], 1
    %15 = vsyncpa %s14, 0
    loop: start=0, step=1, limit=4
    $region2: #{tpu_custom_call.1} parent=1 // loop_pre_header
      _
    $region3: #{tpu_custom_call.1} parent=1 // loop_header
      %s17 = sphi 0, %s21
      %p18 = scmp.ge.s32.totalorder %s17, 4
      %s27 = sphi 0, %s29
      %s30 = sphi 0, %s27
      %s31 = sphi 0, %s30
      %s47 = sphi 0, %s31
      %s51 = sphi 0, %s51
      %s53 = sphi 0, %s51
      %s54 = sphi 0, %s53
      %s68 = sphi 0, %s54
      %s72 = sphi 0, %s72
      %s74 = sphi 0, %s72
      %s75 = sphi 0, %s74
      %s89 = sphi 0, %s75
      %s95 = sphi 0, %s97
      %s98 = sphi 0, %s95
      %s99 = sphi 0, %s98
      %s115 = sphi 0, %s99
    $region4: #{tpu_custom_call.1} parent=1 // loop_header_branch
      %20 = sbr.rel (%p18) target = $region8
    $region5: #{tpu_custom_call.1} parent=1 // loop_body
      %s22 = ssub.s32 %s17, 1
      %s23 = ssub.s32 %s17, 2
      %s24 = sadd.s32 %s17, 1
      %s25 = ssub.s32 %s17, %s24
      %p26 = scmp.eq.s32.totalorder %s25, 0
      %s28 = sadd.s32 %s27, 1
      %s29 = scalar_select %p26, %s27, %s28
      %p32 = pneg %p26
      %p33 = scmp.eq.s32.totalorder %s17, 1
      %p34 = por %p32, %p33
      %p35 = scmp.ne.s32.totalorder %s27, %s30
      %p36 = scmp.eq.s32.totalorder %s17, 0
      %p37 = por %p35, %p36
      %p38 = scmp.ne.s32.totalorder %s27, %s30
      %p39 = scmp.eq.s32.totalorder %s22, 1
      %p40 = por %p38, %p39
      %p41 = scmp.ne.s32.totalorder %s30, %s31
      %p42 = scmp.eq.s32.totalorder %s22, 0
      %p43 = por %p41, %p42
      %p44 = scmp.ne.s32.totalorder %s30, %s31
      %p45 = scmp.eq.s32.totalorder %s23, 1
      %p46 = por %p44, %p45
      %p48 = scmp.ne.s32.totalorder %s31, %s47
      %p49 = scmp.eq.s32.totalorder %s23, 0
      %p50 = por %p48, %p49
      %s52 = sadd.s32 %s51, 1
      %p55 = scmp.eq.s32.totalorder %s17, 1
      %p56 = scmp.ne.s32.totalorder %s51, %s53
      %p57 = scmp.eq.s32.totalorder %s17, 0
      %p58 = por %p56, %p57
      %p59 = scmp.ne.s32.totalorder %s51, %s53
      %p60 = scmp.eq.s32.totalorder %s22, 1
      %p61 = por %p59, %p60
      %p62 = scmp.ne.s32.totalorder %s53, %s54
      %p63 = scmp.eq.s32.totalorder %s22, 0
      %p64 = por %p62, %p63
      %p65 = scmp.ne.s32.totalorder %s53, %s54
      %p66 = scmp.eq.s32.totalorder %s23, 1
      %p67 = por %p65, %p66
      %p69 = scmp.ne.s32.totalorder %s54, %s68
      %p70 = scmp.eq.s32.totalorder %s23, 0
      %p71 = por %p69, %p70
      %s73 = sadd.s32 %s72, 1
      %p76 = scmp.eq.s32.totalorder %s17, 1
      %p77 = scmp.ne.s32.totalorder %s72, %s74
      %p78 = scmp.eq.s32.totalorder %s17, 0
      %p79 = por %p77, %p78
      %p80 = scmp.ne.s32.totalorder %s72, %s74
      %p81 = scmp.eq.s32.totalorder %s22, 1
      %p82 = por %p80, %p81
      %p83 = scmp.ne.s32.totalorder %s74, %s75
      %p84 = scmp.eq.s32.totalorder %s22, 0
      %p85 = por %p83, %p84
      %p86 = scmp.ne.s32.totalorder %s74, %s75
      %p87 = scmp.eq.s32.totalorder %s23, 1
      %p88 = por %p86, %p87
      %p90 = scmp.ne.s32.totalorder %s75, %s89
      %p91 = scmp.eq.s32.totalorder %s23, 0
      %p92 = por %p90, %p91
      %s93 = ssub.s32 %s17, %s24
      %p94 = scmp.eq.s32.totalorder %s93, 0
      %s96 = sadd.s32 %s95, 1
      %s97 = scalar_select %p94, %s95, %s96
      %p100 = pneg %p94
      %p101 = scmp.eq.s32.totalorder %s17, 1
      %p102 = por %p100, %p101
      %p103 = scmp.ne.s32.totalorder %s95, %s98
      %p104 = scmp.eq.s32.totalorder %s17, 0
      %p105 = por %p103, %p104
      %p106 = scmp.ne.s32.totalorder %s95, %s98
      %p107 = scmp.eq.s32.totalorder %s22, 1
      %p108 = por %p106, %p107
      %p109 = scmp.ne.s32.totalorder %s98, %s99
      %p110 = scmp.eq.s32.totalorder %s22, 0
      %p111 = por %p109, %p110
      %p112 = scmp.ne.s32.totalorder %s98, %s99
      %p113 = scmp.eq.s32.totalorder %s23, 1
      %p114 = por %p112, %p113
      %p116 = scmp.ne.s32.totalorder %s99, %s115
      %p117 = scmp.eq.s32.totalorder %s23, 0
      %p118 = por %p116, %p117
      %p119 = scmp.le.s32.totalorder 1, %s17
      %p120 = scmp.lt.s32.totalorder %s17, 3
      %p121 = pnand %p119, %p120
      %p122 = pneg %p121
      // Predicated region
      $region9: #{tpu_custom_call.1} parent=5 // pred_check
        _
      $region10: #{tpu_custom_call.1} parent=5 // pred_check_branch
        %124 = sbr.rel (%p121) target = $region12
      $region11: #{tpu_custom_call.1} parent=5 // pred_region
        %s125 = ssub.s32 %s17, 1
        // Predicated region
        $region13: #{tpu_custom_call.1} parent=11 // pred_check
          %p126 = pneg %p64
        $region14: #{tpu_custom_call.1} parent=11 // pred_check_branch
          %128 = sbr.rel (%p126) target = $region16
        $region15: #{tpu_custom_call.1} parent=11 // pred_region
          %130 = vsyncadd [#allocation5], 0
          %s132 = sshll.u32 %s1, 4
          %s133 = int_to_ptr.hbm [resolvable:$true] %s132
          %135 = dma.hbm_to_smem %s133, 32, [#allocation7], [#allocation5]
        $region16: #{tpu_custom_call.1} parent=11 // pred_fallthru
          _
        // Predicated region
        $region17: #{tpu_custom_call.1} parent=11 // pred_check
          %p136 = pneg %p85
        $region18: #{tpu_custom_call.1} parent=11 // pred_check_branch
          %138 = sbr.rel (%p136) target = $region20
        $region19: #{tpu_custom_call.1} parent=11 // pred_region
          %140 = vsyncadd [#allocation6], 0
          %s142 = sshll.u32 %s2, 4
          %s143 = int_to_ptr.vmem [resolvable:$true] %s142
          %145 = dma.vmem_to_smem %s143, 16, [#allocation8], [#allocation6]
        $region20: #{tpu_custom_call.1} parent=11 // pred_fallthru
          _
      $region12: #{tpu_custom_call.1} parent=5 // pred_fallthru
        _
      %p146 = scmp.lt.s32.totalorder %s17, 2
      // Predicated region
      $region21: #{tpu_custom_call.1} parent=5 // pred_check
        %p147 = pneg %p146
      $region22: #{tpu_custom_call.1} parent=5 // pred_check_branch
        %149 = sbr.rel (%p147) target = $region24
      $region23: #{tpu_custom_call.1} parent=5 // pred_region
        // Predicated region
        $region25: #{tpu_custom_call.1} parent=23 // pred_check
          %p150 = pneg %p37
        $region26: #{tpu_custom_call.1} parent=23 // pred_check_branch
          %152 = sbr.rel (%p150) target = $region28
        $region27: #{tpu_custom_call.1} parent=23 // pred_region
          %s153 = sand.u32 %s27, 1
          %s154 = scalar_lea.sflag [#allocation3], %s153
          %s155 = sand.u32 %s27, 1
          %s156 = smul.addr %s155, 32
          %s157 = scalar_lea.vmem [#allocation2], %s156
          %s158 = smul.u32 4, %s17
          %160 = vsyncadd %s154, 0
          %s161 = smul.addr %s158, 8
          %s162 = scalar_lea.hbm %s0, %s161
          %s164 = sshll.u32 %s162, 4
          %s165 = int_to_ptr.hbm [resolvable:$true] %s164
          %s166 = sshll.u32 %s157, 4
          %s167 = int_to_ptr.vmem [resolvable:$true] %s166
          %169 = dma.hbm_to_vmem [thread:$0]  %s165, 512, %s167, %s154
        $region28: #{tpu_custom_call.1} parent=23 // pred_fallthru
          _
      $region24: #{tpu_custom_call.1} parent=5 // pred_fallthru
        _
      %p170 = scmp.le.s32.totalorder 1, %s17
      %p171 = scmp.lt.s32.totalorder %s17, 3
      %p172 = pnand %p170, %p171
      %p173 = pneg %p172
      // Predicated region
      $region29: #{tpu_custom_call.1} parent=5 // pred_check
        _
      $region30: #{tpu_custom_call.1} parent=5 // pred_check_branch
        %175 = sbr.rel (%p172) target = $region32
      $region31: #{tpu_custom_call.1} parent=5 // pred_region
        %s176 = ssub.s32 %s17, 1
        %s177 = sand.u32 %s30, 1
        %s178 = scalar_lea.sflag [#allocation3], %s177
        %s179 = sand.u32 %s30, 1
        %s180 = smul.addr %s179, 32
        %s181 = scalar_lea.vmem [#allocation2], %s180
        // Predicated region
        $region33: #{tpu_custom_call.1} parent=31 // pred_check
          %p182 = pneg %p43
        $region34: #{tpu_custom_call.1} parent=31 // pred_check_branch
          %184 = sbr.rel (%p182) target = $region36
        $region35: #{tpu_custom_call.1} parent=31 // pred_region
          %186 = dma.done %s178, 512
        $region36: #{tpu_custom_call.1} parent=31 // pred_fallthru
          _
        // Predicated region
        $region37: #{tpu_custom_call.1} parent=31 // pred_check
          %p187 = pneg %p64
        $region38: #{tpu_custom_call.1} parent=31 // pred_check_branch
          %189 = sbr.rel (%p187) target = $region40
        $region39: #{tpu_custom_call.1} parent=31 // pred_region
          %191 = dma.done [#allocation5], 32
        $region40: #{tpu_custom_call.1} parent=31 // pred_fallthru
          _
        // Predicated region
        $region41: #{tpu_custom_call.1} parent=31 // pred_check
          %p192 = pneg %p85
        $region42: #{tpu_custom_call.1} parent=31 // pred_check_branch
          %194 = sbr.rel (%p192) target = $region44
        $region43: #{tpu_custom_call.1} parent=31 // pred_region
          %196 = dma.done [#allocation6], 16
        $region44: #{tpu_custom_call.1} parent=31 // pred_fallthru
          _
        %197 = sfence
        %s198 = sand.u32 %s30, 1
        %s199 = scalar_lea.sflag [#allocation3], %s198
        %s200 = sand.u32 %s30, 1
        %s201 = smul.addr %s200, 32
        %s202 = scalar_lea.vmem [#allocation2], %s201
        %p203 = pneg %p43
        %p204 = pneg %p40
        %p205 = pneg %p64
        %p206 = pneg %p61
        %p207 = pneg %p85
        %p208 = pneg %p82
        %p209 = pneg %p111
        %p210 = pneg %p108
        %s211 = sand.u32 %s98, 1
        %s212 = scalar_lea.sflag [#allocation4], %s211
        %s213 = sand.u32 %s98, 1
        %s214 = smul.addr %s213, 32
        %s215 = scalar_lea.vmem [#allocation9], %s214
        %s216 = smul.u32 4, %s22
        %s217 = smul.u32 4, %s22
        %v218 = vld [vmem:[%s181] sm:$0x1f]
        %v219 = vld [vmem:[%s181 + $0x8] sm:$0x1f]
        %v220 = vld [vmem:[%s181 + $0x10] sm:$0x1f]
        %v221 = vld [vmem:[%s181 + $0x18] sm:$0x1f]
        %s222 = sld [smem:[#allocation7]]
        %v223 = vstv %s222
        %v224 = vmul.f32 %v223, %v218
        %v225 = vmul.f32 %v223, %v219
        %v226 = vmul.f32 %v223, %v220
        %v227 = vmul.f32 %v223, %v221
        %s228 = sld [smem:[#allocation7 + $0x1]]
        %v229 = vstv %s228
        %v230 = vmul.f32 %v229, %v218
        %v231 = vmul.f32 %v229, %v219
        %v232 = vmul.f32 %v229, %v220
        %v233 = vmul.f32 %v229, %v221
        %v238 = vrot.slane %v230, 1
        %v239 = vrot.slane %v231, 1
        %v240 = vrot.slane %v232, 1
        %v241 = vrot.slane %v233, 1
        %v246 = vadd.f32 %v224, %v238
        %v247 = vadd.f32 %v225, %v239
        %v248 = vadd.f32 %v226, %v240
        %v249 = vadd.f32 %v227, %v241
        %s250 = sld [smem:[#allocation7 + $0x2]]
        %v251 = vstv %s250
        %v252 = vmul.f32 %v251, %v218
        %v253 = vmul.f32 %v251, %v219
        %v254 = vmul.f32 %v251, %v220
        %v255 = vmul.f32 %v251, %v221
        %v260 = vrot.slane %v252, 2
        %v261 = vrot.slane %v253, 2
        %v262 = vrot.slane %v254, 2
        %v263 = vrot.slane %v255, 2
        %v268 = vadd.f32 %v246, %v260
        %v269 = vadd.f32 %v247, %v261
        %v270 = vadd.f32 %v248, %v262
        %v271 = vadd.f32 %v249, %v263
        %s272 = sld [smem:[#allocation7 + $0x3]]
        %v273 = vstv %s272
        %v274 = vmul.f32 %v273, %v218
        %v275 = vmul.f32 %v273, %v219
        %v276 = vmul.f32 %v273, %v220
        %v277 = vmul.f32 %v273, %v221
        %v282 = vrot.slane %v274, 3
        %v283 = vrot.slane %v275, 3
        %v284 = vrot.slane %v276, 3
        %v285 = vrot.slane %v277, 3
        %v290 = vadd.f32 %v268, %v282
        %v291 = vadd.f32 %v269, %v283
        %v292 = vadd.f32 %v270, %v284
        %v293 = vadd.f32 %v271, %v285
        %s294 = sld [smem:[#allocation7 + $0x4]]
        %v295 = vstv %s294
        %v296 = vmul.f32 %v295, %v218
        %v297 = vmul.f32 %v295, %v219
        %v298 = vmul.f32 %v295, %v220
        %v299 = vmul.f32 %v295, %v221
        %v304 = vrot.slane %v296, 4
        %v305 = vrot.slane %v297, 4
        %v306 = vrot.slane %v298, 4
        %v307 = vrot.slane %v299, 4
        %v312 = vadd.f32 %v290, %v304
        %v313 = vadd.f32 %v291, %v305
        %v314 = vadd.f32 %v292, %v306
        %v315 = vadd.f32 %v293, %v307
        %v316 = vmax.f32 %v312, 0.0
        %v317 = vmax.f32 %v313, 0.0
        %v318 = vmax.f32 %v314, 0.0
        %v319 = vmax.f32 %v315, 0.0
        %s320 = sld [smem:[#allocation7 + $0x80]]
        %v321 = vstv %s320
        %v322 = vmul.f32 %v321, %v218
        %v323 = vmul.f32 %v321, %v219
        %v324 = vmul.f32 %v321, %v220
        %v325 = vmul.f32 %v321, %v221
        %s326 = sld [smem:[#allocation7 + $0x81]]
        %v327 = vstv %s326
        %v328 = vmul.f32 %v327, %v218
        %v329 = vmul.f32 %v327, %v219
        %v330 = vmul.f32 %v327, %v220
        %v331 = vmul.f32 %v327, %v221
        %v336 = vrot.slane %v328, 1
        %v337 = vrot.slane %v329, 1
        %v338 = vrot.slane %v330, 1
        %v339 = vrot.slane %v331, 1
        %v344 = vadd.f32 %v322, %v336
        %v345 = vadd.f32 %v323, %v337
        %v346 = vadd.f32 %v324, %v338
        %v347 = vadd.f32 %v325, %v339
        %s348 = sld [smem:[#allocation7 + $0x82]]
        %v349 = vstv %s348
        %v350 = vmul.f32 %v349, %v218
        %v351 = vmul.f32 %v349, %v219
        %v352 = vmul.f32 %v349, %v220
        %v353 = vmul.f32 %v349, %v221
        %v358 = vrot.slane %v350, 2
        %v359 = vrot.slane %v351, 2
        %v360 = vrot.slane %v352, 2
        %v361 = vrot.slane %v353, 2
        %v366 = vadd.f32 %v344, %v358
        %v367 = vadd.f32 %v345, %v359
        %v368 = vadd.f32 %v346, %v360
        %v369 = vadd.f32 %v347, %v361
        %s370 = sld [smem:[#allocation7 + $0x83]]
        %v371 = vstv %s370
        %v372 = vmul.f32 %v371, %v218
        %v373 = vmul.f32 %v371, %v219
        %v374 = vmul.f32 %v371, %v220
        %v375 = vmul.f32 %v371, %v221
        %v380 = vrot.slane %v372, 3
        %v381 = vrot.slane %v373, 3
        %v382 = vrot.slane %v374, 3
        %v383 = vrot.slane %v375, 3
        %v388 = vadd.f32 %v366, %v380
        %v389 = vadd.f32 %v367, %v381
        %v390 = vadd.f32 %v368, %v382
        %v391 = vadd.f32 %v369, %v383
        %s392 = sld [smem:[#allocation7 + $0x84]]
        %v393 = vstv %s392
        %v394 = vmul.f32 %v393, %v218
        %v395 = vmul.f32 %v393, %v219
        %v396 = vmul.f32 %v393, %v220
        %v397 = vmul.f32 %v393, %v221
        %v402 = vrot.slane %v394, 4
        %v403 = vrot.slane %v395, 4
        %v404 = vrot.slane %v396, 4
        %v405 = vrot.slane %v397, 4
        %v410 = vadd.f32 %v388, %v402
        %v411 = vadd.f32 %v389, %v403
        %v412 = vadd.f32 %v390, %v404
        %v413 = vadd.f32 %v391, %v405
        %v414 = vmax.f32 %v410, 0.0
        %v415 = vmax.f32 %v411, 0.0
        %v416 = vmax.f32 %v412, 0.0
        %v417 = vmax.f32 %v413, 0.0
        %v418 = vmul.f32 %v316, %v223
        %v419 = vmul.f32 %v317, %v223
        %v420 = vmul.f32 %v318, %v223
        %v421 = vmul.f32 %v319, %v223
        %v422 = vmul.f32 %v414, %v321
        %v423 = vmul.f32 %v415, %v321
        %v424 = vmul.f32 %v416, %v321
        %v425 = vmul.f32 %v417, %v321
        %v426 = vadd.f32 %v418, %v422
        %v427 = vadd.f32 %v419, %v423
        %v428 = vadd.f32 %v420, %v424
        %v429 = vadd.f32 %v421, %v425
        %s430 = sld [smem:[#allocation8]]
        %v431 = vstv %s430
        %v432 = vadd.f32 %v426, %v431
        %v433 = vadd.f32 %v427, %v431
        %v434 = vadd.f32 %v428, %v431
        %v435 = vadd.f32 %v429, %v431
        %v436 = vmax.f32 %v432, 0.0
        %v437 = vmax.f32 %v433, 0.0
        %v438 = vmax.f32 %v434, 0.0
        %v439 = vmax.f32 %v435, 0.0
        %v444 = vrot.slane %v437, 7
        %v445 = vrot.slane %v438, 6
        %v446 = vrot.slane %v439, 5
        %vm447 = vcmask 1040384
        %v448 = vsel %vm447, %v436, %v444
        %vm449 = vcmask 1042434
        %v450 = vsel %vm449, %v445, %v446
        %vm451 = vcmask 1041408
        %v452 = vsel %vm451, %v448, %v450
        %v454 = vlaneseq
        %vm455 = vcmp.ge.s32.totalorder %v454, 0
        %vm456 = vcmp.lt.s32.totalorder %v454, 512
        %vm457 = vmand %vm455, %vm456
        %458 = vst.msk [vmem:[%s215] ss:$8 sm:$0xf] %vm457, %v452
        %459 = vst.msk [vmem:[%s215] ss:$8 sm:$0x0] %vm457, %v452
        %s460 = sld [smem:[#allocation7 + $0x1]]
        %v461 = vstv %s460
        %v462 = vmul.f32 %v316, %v461
        %v463 = vmul.f32 %v317, %v461
        %v464 = vmul.f32 %v318, %v461
        %v465 = vmul.f32 %v319, %v461
        %s466 = sld [smem:[#allocation7 + $0x81]]
        %v467 = vstv %s466
        %v468 = vmul.f32 %v414, %v467
        %v469 = vmul.f32 %v415, %v467
        %v470 = vmul.f32 %v416, %v467
        %v471 = vmul.f32 %v417, %v467
        %v472 = vadd.f32 %v462, %v468
        %v473 = vadd.f32 %v463, %v469
        %v474 = vadd.f32 %v464, %v470
        %v475 = vadd.f32 %v465, %v471
        %s476 = sld [smem:[#allocation8 + $0x1]]
        %v477 = vstv %s476
        %v478 = vadd.f32 %v472, %v477
        %v479 = vadd.f32 %v473, %v477
        %v480 = vadd.f32 %v474, %v477
        %v481 = vadd.f32 %v475, %v477
        %v482 = vmax.f32 %v478, 0.0
        %v483 = vmax.f32 %v479, 0.0
        %v484 = vmax.f32 %v480, 0.0
        %v485 = vmax.f32 %v481, 0.0
        %v490 = vrot.slane %v483, 7
        %v491 = vrot.slane %v484, 6
        %v492 = vrot.slane %v485, 5
        %v493 = vsel %vm447, %v482, %v490
        %v494 = vsel %vm449, %v491, %v492
        %v495 = vsel %vm451, %v493, %v494
        %s497 = scalar_lea.vmem %s215, 1 [#allocation9]
        %498 = vst.msk [vmem:[%s497] ss:$8 sm:$0xf] %vm457, %v495
        %499 = vst.msk [vmem:[%s497] ss:$8 sm:$0x0] %vm457, %v495
        %s500 = sld [smem:[#allocation7 + $0x2]]
        %v501 = vstv %s500
        %v502 = vmul.f32 %v316, %v501
        %v503 = vmul.f32 %v317, %v501
        %v504 = vmul.f32 %v318, %v501
        %v505 = vmul.f32 %v319, %v501
        %s506 = sld [smem:[#allocation7 + $0x82]]
        %v507 = vstv %s506
        %v508 = vmul.f32 %v414, %v507
        %v509 = vmul.f32 %v415, %v507
        %v510 = vmul.f32 %v416, %v507
        %v511 = vmul.f32 %v417, %v507
        %v512 = vadd.f32 %v502, %v508
        %v513 = vadd.f32 %v503, %v509
        %v514 = vadd.f32 %v504, %v510
        %v515 = vadd.f32 %v505, %v511
        %s516 = sld [smem:[#allocation8 + $0x2]]
        %v517 = vstv %s516
        %v518 = vadd.f32 %v512, %v517
        %v519 = vadd.f32 %v513, %v517
        %v520 = vadd.f32 %v514, %v517
        %v521 = vadd.f32 %v515, %v517
        %v522 = vmax.f32 %v518, 0.0
        %v523 = vmax.f32 %v519, 0.0
        %v524 = vmax.f32 %v520, 0.0
        %v525 = vmax.f32 %v521, 0.0
        %v530 = vrot.slane %v523, 7
        %v531 = vrot.slane %v524, 6
        %v532 = vrot.slane %v525, 5
        %v533 = vsel %vm447, %v522, %v530
        %v534 = vsel %vm449, %v531, %v532
        %v535 = vsel %vm451, %v533, %v534
        %s537 = scalar_lea.vmem %s215, 2 [#allocation9]
        %538 = vst.msk [vmem:[%s537] ss:$8 sm:$0xf] %vm457, %v535
        %539 = vst.msk [vmem:[%s537] ss:$8 sm:$0x0] %vm457, %v535
        %s540 = sld [smem:[#allocation7 + $0x3]]
        %v541 = vstv %s540
        %v542 = vmul.f32 %v316, %v541
        %v543 = vmul.f32 %v317, %v541
        %v544 = vmul.f32 %v318, %v541
        %v545 = vmul.f32 %v319, %v541
        %s546 = sld [smem:[#allocation7 + $0x83]]
        %v547 = vstv %s546
        %v548 = vmul.f32 %v414, %v547
        %v549 = vmul.f32 %v415, %v547
        %v550 = vmul.f32 %v416, %v547
        %v551 = vmul.f32 %v417, %v547
        %v552 = vadd.f32 %v542, %v548
        %v553 = vadd.f32 %v543, %v549
        %v554 = vadd.f32 %v544, %v550
        %v555 = vadd.f32 %v545, %v551
        %s556 = sld [smem:[#allocation8 + $0x3]]
        %v557 = vstv %s556
        %v558 = vadd.f32 %v552, %v557
        %v559 = vadd.f32 %v553, %v557
        %v560 = vadd.f32 %v554, %v557
        %v561 = vadd.f32 %v555, %v557
        %v562 = vmax.f32 %v558, 0.0
        %v563 = vmax.f32 %v559, 0.0
        %v564 = vmax.f32 %v560, 0.0
        %v565 = vmax.f32 %v561, 0.0
        %v570 = vrot.slane %v563, 7
        %v571 = vrot.slane %v564, 6
        %v572 = vrot.slane %v565, 5
        %v573 = vsel %vm447, %v562, %v570
        %v574 = vsel %vm449, %v571, %v572
        %v575 = vsel %vm451, %v573, %v574
        %s577 = scalar_lea.vmem %s215, 3 [#allocation9]
        %578 = vst.msk [vmem:[%s577] ss:$8 sm:$0xf] %vm457, %v575
        %579 = vst.msk [vmem:[%s577] ss:$8 sm:$0x0] %vm457, %v575
        %s580 = sld [smem:[#allocation7 + $0x4]]
        %v581 = vstv %s580
        %v582 = vmul.f32 %v316, %v581
        %v583 = vmul.f32 %v317, %v581
        %v584 = vmul.f32 %v318, %v581
        %v585 = vmul.f32 %v319, %v581
        %s586 = sld [smem:[#allocation7 + $0x84]]
        %v587 = vstv %s586
        %v588 = vmul.f32 %v414, %v587
        %v589 = vmul.f32 %v415, %v587
        %v590 = vmul.f32 %v416, %v587
        %v591 = vmul.f32 %v417, %v587
        %v592 = vadd.f32 %v582, %v588
        %v593 = vadd.f32 %v583, %v589
        %v594 = vadd.f32 %v584, %v590
        %v595 = vadd.f32 %v585, %v591
        %s596 = sld [smem:[#allocation8 + $0x4]]
        %v597 = vstv %s596
        %v598 = vadd.f32 %v592, %v597
        %v599 = vadd.f32 %v593, %v597
        %v600 = vadd.f32 %v594, %v597
        %v601 = vadd.f32 %v595, %v597
        %v602 = vmax.f32 %v598, 0.0
        %v603 = vmax.f32 %v599, 0.0
        %v604 = vmax.f32 %v600, 0.0
        %v605 = vmax.f32 %v601, 0.0
        %v610 = vrot.slane %v603, 7
        %v611 = vrot.slane %v604, 6
        %v612 = vrot.slane %v605, 5
        %v613 = vsel %vm447, %v602, %v610
        %v614 = vsel %vm449, %v611, %v612
        %v615 = vsel %vm451, %v613, %v614
        %s617 = scalar_lea.vmem %s215, 4 [#allocation9]
        %618 = vst.msk [vmem:[%s617] ss:$8 sm:$0xf] %vm457, %v615
        %619 = vst.msk [vmem:[%s617] ss:$8 sm:$0x0] %vm457, %v615
        %s620 = sand.u32 %s98, 1
        %s621 = scalar_lea.sflag [#allocation4], %s620
        %s622 = sand.u32 %s98, 1
        %s623 = smul.addr %s622, 32
        %s624 = scalar_lea.vmem [#allocation9], %s623
        // Predicated region
        $region45: #{tpu_custom_call.1} parent=31 // pred_check
          %p625 = pneg %p108
        $region46: #{tpu_custom_call.1} parent=31 // pred_check_branch
          %627 = sbr.rel (%p625) target = $region48
        $region47: #{tpu_custom_call.1} parent=31 // pred_region
          %s628 = smul.u32 4, %s22
          %630 = vsyncadd %s621, 0
          %s631 = smul.addr %s628, 8
          %s632 = scalar_lea.hbm %s3, %s631
          %s634 = sshll.u32 %s624, 4
          %s635 = int_to_ptr.vmem [resolvable:$true] %s634
          %s636 = sshll.u32 %s632, 4
          %s637 = int_to_ptr.hbm [resolvable:$true] %s636
          %639 = dma.vmem_to_hbm [thread:$0]  %s635, 512, %s637, %s621
        $region48: #{tpu_custom_call.1} parent=31 // pred_fallthru
          _
      $region32: #{tpu_custom_call.1} parent=5 // pred_fallthru
        _
      %p640 = scmp.le.s32.totalorder 2, %s17
      // Predicated region
      $region49: #{tpu_custom_call.1} parent=5 // pred_check
        %p641 = pneg %p640
      $region50: #{tpu_custom_call.1} parent=5 // pred_check_branch
        %643 = sbr.rel (%p641) target = $region52
      $region51: #{tpu_custom_call.1} parent=5 // pred_region
        %s644 = ssub.s32 %s17, 2
        // Predicated region
        $region53: #{tpu_custom_call.1} parent=51 // pred_check
          %p645 = pneg %p114
        $region54: #{tpu_custom_call.1} parent=51 // pred_check_branch
          %647 = sbr.rel (%p645) target = $region56
        $region55: #{tpu_custom_call.1} parent=51 // pred_region
          %s648 = sand.u32 %s99, 1
          %s649 = scalar_lea.sflag [#allocation4], %s648
          %s650 = sand.u32 %s99, 1
          %s651 = smul.addr %s650, 32
          %s652 = scalar_lea.vmem [#allocation9], %s651
          %654 = dma.done %s649, 512
        $region56: #{tpu_custom_call.1} parent=51 // pred_fallthru
          _
      $region52: #{tpu_custom_call.1} parent=5 // pred_fallthru
        _
    $region6: #{tpu_custom_call.1} parent=1 // loop_footer
      %s21 = sadd.s32 1, %s17
    $region7: #{tpu_custom_call.1} parent=1 // loop_footer_branch
      %16 = sbr.rel target = $region3
    $region8: #{tpu_custom_call.1} parent=1 // loop_exit
      _
    %655 = vsyncpa [#allocation3], 1
    %s656 = scalar_lea.sflag [#allocation3], 1
    %657 = vsyncpa %s656, 1
    %658 = vsyncpa [#allocation4], 1
    %s659 = scalar_lea.sflag [#allocation4], 1
    %660 = vsyncpa %s659, 1
    %661 = vsyncpa [#allocation5], 1
    %s662 = scalar_lea.sflag [#allocation5], 1
    %663 = vsyncpa %s662, 1
    %664 = vsyncpa [#allocation6], 1
    %s665 = scalar_lea.sflag [#allocation6], 1
    %666 = vsyncpa %s665, 1

</llo_original>
